<compile_context>
chip_gen: v6e
topology: v6e:2x2x1
jax: 0.10.0
libtpu: 0.0.40
codegen_flags: <defaults>
</compile_context>

<pallas_src>
import functools
import math

import jax
import jax.numpy as jnp
from jax.experimental import pallas as pl
from jax.experimental.pallas import tpu as pltpu

_LANES = 128
_SUBLANES = 8


def _elem_loss(o, l):
    # Concrete per-element loss (squared error), computed in f32.
    if o.dtype != jnp.float32:
        o = o.astype(jnp.float32)
    if l.dtype != jnp.float32:
        l = l.astype(jnp.float32)
    d = o - l
    return d * d


def _reduce_kernel(out_ref, lab_ref, res_ref, acc_ref, *, inv_n):
    """grid = (num_splits, inner_steps).

    Each split keeps a vreg-shaped (8, 128) f32 accumulator in VMEM scratch;
    per step we only do elementwise VPU adds (sum over the sublane-block
    axis), and the expensive cross-lane reduction is deferred to a single
    trivial jnp.sum over the (num_splits*8, 128) partial output.
    """
    i = pl.program_id(1)

    @pl.when(i == 0)
    def _():
        acc_ref[...] = jnp.zeros_like(acc_ref)

    loss = _elem_loss(out_ref[...], lab_ref[...])
    # (tile_rows, 128) -> (tile_rows//8, 8, 128): reshape stays on (8, 128)
    # tile boundaries, so it is layout-free; axis-0 sum is pure VPU adds.
    acc_ref[...] += jnp.sum(loss.reshape(-1, _SUBLANES, _LANES), axis=0)

    @pl.when(i == pl.num_programs(1) - 1)
    def _():
        res_ref[...] = acc_ref[...] * inv_n


def _elementwise_kernel(out_ref, lab_ref, loss_ref):
    loss_ref[...] = _elem_loss(out_ref[...], lab_ref[...])


def _to_lane_dense(x, rows):
    """Flatten, zero-pad to rows*128 elements, reshape to (rows, 128)."""
    flat = x.reshape(-1)
    pad = rows * _LANES - flat.shape[0]
    if pad:
        flat = jnp.pad(flat, (0, pad))
    return flat.reshape(rows, _LANES)


def house_price_loss(outputs, labels, reduction="mean", *, max_tile_rows=4096):
    """Pallas implementation of BaseHousePriceLoss.forward (squared error)."""
    assert outputs.shape == labels.shape
    orig_shape = outputs.shape
    out_dtype = outputs.dtype
    n_total = math.prod(orig_shape) if orig_shape else 1

    # Lane-dense layout: rows of 128 lanes, rows rounded up to a sublane
    # multiple (8), then to the tile / split boundary.
    rows_data = -(-n_total // _LANES)
    rows_data = -(-rows_data // _SUBLANES) * _SUBLANES
    tile_rows = min(max_tile_rows, rows_data)
    steps = -(-rows_data // tile_rows)

    if reduction in ("mean", "sum"):
        # Leading size-2 parallel axis -> both TensorCores on v7x.
        num_splits = 2 if steps >= 2 else 1
        steps = -(-steps // num_splits) * num_splits
        rows = steps * tile_rows
        inner = steps // num_splits

        o2d = _to_lane_dense(outputs, rows)
        l2d = _to_lane_dense(labels, rows)

        inv_n = (1.0 / float(n_total)) if reduction == "mean" else 1.0
        kernel = functools.partial(_reduce_kernel, inv_n=inv_n)

        partial = pl.pallas_call(
            kernel,
            out_shape=jax.ShapeDtypeStruct(
                (num_splits * _SUBLANES, _LANES), jnp.float32
            ),
            grid_spec=pltpu.PrefetchScalarGridSpec(
                num_scalar_prefetch=0,
                grid=(num_splits, inner),
                in_specs=[
                    pl.BlockSpec(
                        (tile_rows, _LANES), lambda c, i: (c * inner + i, 0)
                    ),
                    pl.BlockSpec(
                        (tile_rows, _LANES), lambda c, i: (c * inner + i, 0)
                    ),
                ],
                out_specs=pl.BlockSpec((_SUBLANES, _LANES), lambda c, i: (c, 0)),
                scratch_shapes=[pltpu.VMEM((_SUBLANES, _LANES), jnp.float32)],
            ),
            compiler_params=pltpu.CompilerParams(
                dimension_semantics=("parallel", "arbitrary")
            ),
        )(o2d, l2d)
        # Final cross-lane reduce of at most 2*8*128 floats (trivial).
        return jnp.sum(partial).astype(out_dtype)

    else:  # reduction == 'none' -> elementwise loss tensor in original shape
        rows = steps * tile_rows
        o2d = _to_lane_dense(outputs, rows)
        l2d = _to_lane_dense(labels, rows)

        loss2d = pl.pallas_call(
            _elementwise_kernel,
            out_shape=jax.ShapeDtypeStruct((rows, _LANES), jnp.float32),
            grid_spec=pltpu.PrefetchScalarGridSpec(
                num_scalar_prefetch=0,
                grid=(steps,),
                in_specs=[
                    pl.BlockSpec((tile_rows, _LANES), lambda i: (i, 0)),
                    pl.BlockSpec((tile_rows, _LANES), lambda i: (i, 0)),
                ],
                out_specs=pl.BlockSpec((tile_rows, _LANES), lambda i: (i, 0)),
            ),
            compiler_params=pltpu.CompilerParams(
                dimension_semantics=("parallel",)
            ),
        )(o2d, l2d)
        loss = loss2d.reshape(-1)[:n_total].reshape(orig_shape)
        return loss.astype(out_dtype)


if __name__ == "__main__":
    key = jax.random.PRNGKey(0)
    k1, k2 = jax.random.split(key)

    # Primary shape: (N, 1) house-price regression layout.
    N, D = 128, 1
    outputs = jax.random.normal(k1, (N, D), dtype=jnp.float32)
    labels = jax.random.normal(k2, (N, D), dtype=jnp.float32)

    loss_mean = jax.block_until_ready(house_price_loss(outputs, labels, "mean"))
    loss_sum = jax.block_until_ready(house_price_loss(outputs, labels, "sum"))
    loss_none = jax.block_until_ready(house_price_loss(outputs, labels, "none"))

    ref = (outputs - labels) ** 2
    assert jnp.allclose(loss_mean, ref.mean(), rtol=1e-5, atol=1e-5)
    assert jnp.allclose(loss_sum, ref.sum(), rtol=1e-5, atol=1e-4)
    assert jnp.allclose(loss_none, ref, rtol=1e-5, atol=1e-5)

    # Ragged batch (not a multiple of 8*128) exercises the zero-padding path.
    N2 = 1000
    o2 = jax.random.normal(k1, (N2, 1), dtype=jnp.float32)
    l2 = jax.random.normal(k2, (N2, 1), dtype=jnp.float32)
    ref2 = (o2 - l2) ** 2
    m2 = jax.block_until_ready(house_price_loss(o2, l2, "mean"))
    nn2 = jax.block_until_ready(house_price_loss(o2, l2, "none"))
    assert jnp.allclose(m2, ref2.mean(), rtol=1e-5, atol=1e-5)
    assert jnp.allclose(nn2, ref2, rtol=1e-5, atol=1e-5)

    # Tiny max_tile_rows forces the 2-split (two-TensorCore) reduce path.
    N3 = 4096
    o3 = jax.random.normal(k1, (N3, 1), dtype=jnp.float32)
    l3 = jax.random.normal(k2, (N3, 1), dtype=jnp.float32)
    ref3 = (o3 - l3) ** 2
    s3 = jax.block_until_ready(house_price_loss(o3, l3, "sum", max_tile_rows=8))
    assert jnp.allclose(s3, ref3.sum(), rtol=1e-5, atol=1e-3)

    print("KERNEL_OK")
</pallas_src>

<mosaic_0001>
module attributes {stable_mosaic.version = 11 : i64} {
  func.func @_reduce_kernel(%arg0: i32, %arg1: i32, %arg2: memref<8x128xf32, #tpu.memory_space<vmem>>, %arg3: memref<8x128xf32, #tpu.memory_space<vmem>>, %arg4: memref<8x128xf32, #tpu.memory_space<vmem>>, %arg5: memref<8x128xf32, #tpu.memory_space<vmem>>) attributes {dimension_semantics = [#tpu.dimension_semantics<parallel>, #tpu.dimension_semantics<arbitrary>], iteration_bounds = array<i64: 1, 1>, scalar_prefetch = 0 : i64, scratch_operands = 1 : i64, tpu.core_type = #tpu.core_type<tc>, window_params = [{transform_indices = @transform_0, window_bounds = array<i64: 8, 128>}, {transform_indices = @transform_1, window_bounds = array<i64: 8, 128>}, {transform_indices = @transform_2, window_bounds = array<i64: 8, 128>}]} {
    %c0_i32 = arith.constant 0 : i32
    %0 = arith.cmpi eq, %arg1, %c0_i32 : i32
    %1 = arith.extui %0 : i1 to i32
    %c0_i32_0 = arith.constant 0 : i32
    %2 = arith.cmpi ne, %1, %c0_i32_0 : i32
    scf.if %2 {
      %cst_10 = arith.constant 0.000000e+00 : f32
      %15 = vector.broadcast %cst_10 : f32 to vector<8x128xf32>
      %c0_11 = arith.constant 0 : index
      %c0_12 = arith.constant 0 : index
      %16 = vector.load %arg5[%c0_11, %c0_12] : memref<8x128xf32, #tpu.memory_space<vmem>>, vector<8x128xf32>
      tpu.vector_store %arg5[%c0_11, %c0_12], %15 {strides = array<i32>} : memref<8x128xf32, #tpu.memory_space<vmem>>, vector<8x128xf32>,
    } else {
    }
    %c0 = arith.constant 0 : index
    %c0_1 = arith.constant 0 : index
    %3 = vector.load %arg2[%c0, %c0_1] : memref<8x128xf32, #tpu.memory_space<vmem>>, vector<8x128xf32>
    %c0_2 = arith.constant 0 : index
    %c0_3 = arith.constant 0 : index
    %4 = vector.load %arg3[%c0_2, %c0_3] : memref<8x128xf32, #tpu.memory_space<vmem>>, vector<8x128xf32>
    %5 = arith.subf %3, %4 : vector<8x128xf32>
    %6 = arith.mulf %5, %5 : vector<8x128xf32>
    %c0_4 = arith.constant 0 : index
    %c0_5 = arith.constant 0 : index
    %7 = vector.load %arg5[%c0_4, %c0_5] : memref<8x128xf32, #tpu.memory_space<vmem>>, vector<8x128xf32>
    %8 = vector.shape_cast %6 : vector<8x128xf32> to vector<1x8x128xf32>
    %cst = arith.constant dense<0.000000e+00> : vector<8x128xf32>
    %9 = vector.multi_reduction <add>, %8, %cst [0] : vector<1x8x128xf32> to vector<8x128xf32>
    %10 = arith.addf %7, %9 : vector<8x128xf32>
    %c0_6 = arith.constant 0 : index
    %c0_7 = arith.constant 0 : index
    %11 = vector.load %arg5[%c0_6, %c0_7] : memref<8x128xf32, #tpu.memory_space<vmem>>, vector<8x128xf32>
    tpu.vector_store %arg5[%c0_6, %c0_7], %10 {strides = array<i32>} : memref<8x128xf32, #tpu.memory_space<vmem>>, vector<8x128xf32>,
    %c0_i32_8 = arith.constant 0 : i32
    %12 = arith.cmpi eq, %arg1, %c0_i32_8 : i32
    %13 = arith.extui %12 : i1 to i32
    %c0_i32_9 = arith.constant 0 : i32
    %14 = arith.cmpi ne, %13, %c0_i32_9 : i32
    scf.if %14 {
      %c0_10 = arith.constant 0 : index
      %c0_11 = arith.constant 0 : index
      %15 = vector.load %arg5[%c0_10, %c0_11] : memref<8x128xf32, #tpu.memory_space<vmem>>, vector<8x128xf32>
      %cst_12 = arith.constant 7.812500e-03 : f32
      %16 = vector.broadcast %cst_12 : f32 to vector<8x128xf32>
      %17 = arith.mulf %15, %16 : vector<8x128xf32>
      %c0_13 = arith.constant 0 : index
      %c0_14 = arith.constant 0 : index
      %18 = vector.load %arg4[%c0_13, %c0_14] : memref<8x128xf32, #tpu.memory_space<vmem>>, vector<8x128xf32>
      tpu.vector_store %arg4[%c0_13, %c0_14], %17 {strides = array<i32>} : memref<8x128xf32, #tpu.memory_space<vmem>>, vector<8x128xf32>,
    } else {
    }
    return
  }
  func.func @transform_0(%arg0: i32, %arg1: i32) -> (i32, i32) {
    %c1_i32 = arith.constant 1 : i32
    %0 = arith.muli %arg0, %c1_i32 : i32
    %1 = arith.addi %0, %arg1 : i32
    %c0_i32 = arith.constant 0 : i32
    %c0_i32_0 = arith.constant 0 : i32
    return %1, %c0_i32 : i32, i32
  }
  func.func @transform_1(%arg0: i32, %arg1: i32) -> (i32, i32) {
    %c1_i32 = arith.constant 1 : i32
    %0 = arith.muli %arg0, %c1_i32 : i32
    %1 = arith.addi %0, %arg1 : i32
    %c0_i32 = arith.constant 0 : i32
    %c0_i32_0 = arith.constant 0 : i32
    return %1, %c0_i32 : i32, i32
  }
  func.func @transform_2(%arg0: i32, %arg1: i32) -> (i32, i32) {
    %c0_i32 = arith.constant 0 : i32
    %c0_i32_0 = arith.constant 0 : i32
    return %arg0, %c0_i32 : i32, i32
  }
}

</mosaic_0001>

<llo_original>
// kernel: tpu_custom_call.1
$region0: #{tpu_custom_call.1}
  #allocation0 [shape = 'u32[]', space=smem, size = 0x4, offset = 0x4, fixed_abs, tag = 'smem constant byte address 0x4 - core index']
  #allocation1 [shape = 'u32[144,128]{1,0:T(1,128)}', space=vmem, size = 0x12000, scoped, tag = 'internal scratch']
  #allocation2 [shape = 'f32[8,128]{1,0:T(8,128)}', space=vmem, size = 0x1000, scoped, tag = 'scratch operand']
  %s0 = inlined_call_operand.hbm [shape: f32[8,128], index: 0, kind: input, shape index: {}]
  %s1 = inlined_call_operand.hbm [shape: f32[8,128], index: 1, kind: input, shape index: {}]
  %s2 = inlined_call_operand.hbm [shape: f32[8,128], index: 2, kind: output, shape index: {}]
  %s3 = sld [smem:[#allocation0]]
  $region34: #{tpu_custom_call.1} parent=0
    _
  %s5 = ssub.s32 1, %s3
  %s6 = scalar_select 0, %s5, %s3
  $region1: #{tpu_custom_call.1} parent=0
    #allocation3 [shape = 'u8[4096]{0}', space=vmem, size = 0x1000, scoped, tag = 'input window, operand 0, single buffered']
    #allocation4 [shape = 's32[1]{0}', space=sflag, size = 0x4, scoped, tag = 'scoped memory for tpu_custom_call.1']
    #allocation5 [shape = 's32[1]{0}', space=sflag, size = 0x4, scoped, tag = 'scoped memory for tpu_custom_call.1']
    #allocation6 [shape = 'u8[4096]{0}', space=vmem, size = 0x1000, scoped, tag = 'input window, operand 1, single buffered']
    #allocation7 [shape = 's32[1]{0}', space=sflag, size = 0x4, scoped, tag = 'scoped memory for tpu_custom_call.1']
    #allocation8 [shape = 'u8[4096]{0}', space=vmem, size = 0x1000, scoped, tag = 'output window, operand 0, single buffered']
    %7 = vsyncpa [#allocation4], 0
    %8 = vsyncpa [#allocation7], 0
    %9 = vsyncpa [#allocation5], 0
    // Predicated region
    $region2: #{tpu_custom_call.1} parent=1 // pred_check
      _
    $region3: #{tpu_custom_call.1} parent=1 // pred_check_branch
      %11 = sbr.rel (0) target = $region5
    $region4: #{tpu_custom_call.1} parent=1 // pred_region
      %s12 = sadd.s32 0, 0
      %s14 = ssub.s32 128, 128
      %15 = vsyncadd [#allocation4], %s14
      %s16 = smul.addr %s12, 128
      %s17 = scalar_lea.hbm %s0, %s16
      %s19 = sshll.u32 [#allocation3], 4
      %s20 = int_to_ptr.vmem [resolvable:$true] %s19
      %22 = dma.hbm_to_vmem [thread:$0]  %s17, 128, %s20, [#allocation4]
    $region5: #{tpu_custom_call.1} parent=1 // pred_fallthru
      _
    // Predicated region
    $region6: #{tpu_custom_call.1} parent=1 // pred_check
      _
    $region7: #{tpu_custom_call.1} parent=1 // pred_check_branch
      %24 = sbr.rel (0) target = $region9
    $region8: #{tpu_custom_call.1} parent=1 // pred_region
      %s25 = sadd.s32 0, 0
      %s27 = ssub.s32 128, 128
      %28 = vsyncadd [#allocation7], %s27
      %s29 = smul.addr %s25, 128
      %s30 = scalar_lea.hbm %s1, %s29
      %s32 = sshll.u32 [#allocation6], 4
      %s33 = int_to_ptr.vmem [resolvable:$true] %s32
      %35 = dma.hbm_to_vmem [thread:$0]  %s30, 128, %s33, [#allocation7]
    $region9: #{tpu_custom_call.1} parent=1 // pred_fallthru
      _
    // Predicated region
    $region10: #{tpu_custom_call.1} parent=1 // pred_check
      _
    $region11: #{tpu_custom_call.1} parent=1 // pred_check_branch
      %37 = sbr.rel (0) target = $region13
    $region12: #{tpu_custom_call.1} parent=1 // pred_region
      %38 = dma.done [#allocation4], 128
    $region13: #{tpu_custom_call.1} parent=1 // pred_fallthru
      _
    // Predicated region
    $region14: #{tpu_custom_call.1} parent=1 // pred_check
      _
    $region15: #{tpu_custom_call.1} parent=1 // pred_check_branch
      %40 = sbr.rel (0) target = $region17
    $region16: #{tpu_custom_call.1} parent=1 // pred_region
      %41 = dma.done [#allocation7], 128
    $region17: #{tpu_custom_call.1} parent=1 // pred_fallthru
      _
    %s42 = sadd.s32 0, 0
    %s43 = sadd.s32 0, 0
    %p44 = scmp.eq.s32.totalorder 0, 0
    // Predicated region
    $region18: #{tpu_custom_call.1} parent=1 // pred_check
      %p45 = pneg %p44
    $region19: #{tpu_custom_call.1} parent=1 // pred_check_branch
      %47 = sbr.rel (%p45) target = $region21
    $region20: #{tpu_custom_call.1} parent=1 // pred_region
      %48 = vst [vmem:[#allocation2] sm:$0xff] 0.0
    $region21: #{tpu_custom_call.1} parent=1 // pred_fallthru
      _
    %v49 = vld [vmem:[#allocation3] sm:$0xff]
    %v50 = vld [vmem:[#allocation6] sm:$0xff]
    %v51 = vsub.f32 %v49, %v50
    %v52 = vmul.f32 %v51, %v51
    %v53 = vld [vmem:[#allocation2] sm:$0xff]
    %v54 = vadd.f32 %v52, 0.0
    %v55 = vadd.f32 %v53, %v54
    %56 = vst [vmem:[#allocation2] sm:$0xff] %v55
    // Predicated region
    $region22: #{tpu_custom_call.1} parent=1 // pred_check
      %p57 = pneg %p44
    $region23: #{tpu_custom_call.1} parent=1 // pred_check_branch
      %59 = sbr.rel (%p57) target = $region25
    $region24: #{tpu_custom_call.1} parent=1 // pred_region
      %v60 = vld [vmem:[#allocation2] sm:$0xff]
      %v61 = vmul.f32 %v60, 0.0078125
      %62 = vst [vmem:[#allocation8] sm:$0xff] %v61
    $region25: #{tpu_custom_call.1} parent=1 // pred_fallthru
      _
    // Predicated region
    $region26: #{tpu_custom_call.1} parent=1 // pred_check
      _
    $region27: #{tpu_custom_call.1} parent=1 // pred_check_branch
      %64 = sbr.rel (0) target = $region29
    $region28: #{tpu_custom_call.1} parent=1 // pred_region
      %s66 = ssub.s32 128, 128
      %67 = vsyncadd [#allocation5], %s66
      %s69 = sshll.u32 [#allocation8], 4
      %s70 = int_to_ptr.vmem [resolvable:$true] %s69
      %72 = dma.vmem_to_hbm [thread:$0]  %s70, 128, %s2, [#allocation5]
    $region29: #{tpu_custom_call.1} parent=1 // pred_fallthru
      _
    // Predicated region
    $region30: #{tpu_custom_call.1} parent=1 // pred_check
      _
    $region31: #{tpu_custom_call.1} parent=1 // pred_check_branch
      %74 = sbr.rel (0) target = $region33
    $region32: #{tpu_custom_call.1} parent=1 // pred_region
      %75 = dma.done [#allocation5], 128
    $region33: #{tpu_custom_call.1} parent=1 // pred_fallthru
      _
    %76 = vsyncpa [#allocation4], 1
    %77 = vsyncpa [#allocation7], 1
    %78 = vsyncpa [#allocation5], 1

</llo_original>
